<compile_context>
chip_gen: v5e
topology: v5e:2x2
jax: 0.10.0
libtpu: 0.0.40
codegen_flags: <defaults>
</compile_context>

<pallas_src>
from collections import namedtuple
from functools import partial

import numpy as np
import jax
import jax.numpy as jnp
from jax.experimental import pallas as pl
from jax.experimental.pallas import tpu as pltpu

UnpoolDescription = namedtuple("UnpoolDescription", ["edge_index", "batch", "cluster_map"])

_TILE_NODES = 256  # node-row tile (multiple of 8/16 sublanes for f32/bf16)


def _round_up(v, m):
    return ((v + m - 1) // m) * m


# ----------------------------------------------------------------------------
# VMEM budgets derived from actual block sizes (clamped; v7x physical is 64 MiB)
# ----------------------------------------------------------------------------
def _proj_vmem_budget(tm, fp):
    b = 2 * tm * fp * 4 + 2 * fp * 8 * 4 + 2 * tm * 8 * 4
    return min(max(int(b * 1.5) + (2 << 20), 8 << 20), 96 << 20)


def _merge_vmem_budget(tn, np_, kp, fp):
    b = 2 * tn * np_ * 4        # S row tiles (f32, double-buffered)
    b += 2 * tn * np_ * 2       # A row tiles (bf16, double-buffered)
    b += 2 * tn * fp * 4        # X row tiles (f32, double-buffered)
    b += 2 * np_ * kp * 4       # resident C (counted at 2 buffers to stay safe)
    b += kp * fp * 4 + kp * kp * 4   # resident accumulators
    b += tn * np_ * 4           # bf16 -> f32 up-cast of the A tile
    b += 3 * tn * kp * 4        # sc / ac / possible transposed-lhs copies
    return min(max(int(b * 1.25) + (4 << 20), 16 << 20), 96 << 20)


# ----------------------------------------------------------------------------
# Pallas kernels / wrappers
# ----------------------------------------------------------------------------
def _node_proj_kernel(x_ref, w_ref, out_ref):
    # x_ref: [TM, Fp] node-feature row tile (zero padded)
    # w_ref: [Fp, 8] weights; column 0 = w_src, column 1 = w_dst (rest zero)
    # out  : [TM, 8]; column 0 = x . w_src, column 1 = x . w_dst
    out_ref[...] = jnp.dot(x_ref[...], w_ref[...], preferred_element_type=jnp.float32)


def pallas_node_projections(x_pad, weight):
    """x_pad: [Np, Fp] f32 zero-padded node features; weight: [2F] f32.

    Returns (p_src, p_dst), each [Np] f32, where p_src = X @ weight[:F],
    p_dst = X @ weight[F:].
    """
    Np, Fp = x_pad.shape
    F = weight.shape[0] // 2

    w_p = jnp.zeros((Fp, 8), jnp.float32)
    w_p = w_p.at[:F, 0].set(weight[:F].astype(jnp.float32))
    w_p = w_p.at[:F, 1].set(weight[F:].astype(jnp.float32))

    tm = min(_TILE_NODES, Np)
    out = pl.pallas_call(
        _node_proj_kernel,
        out_shape=jax.ShapeDtypeStruct((Np, 8), jnp.float32),
        grid=(Np // tm,),
        in_specs=[
            pl.BlockSpec((tm, Fp), lambda i: (i, 0)),
            pl.BlockSpec((Fp, 8), lambda i: (0, 0)),
        ],
        out_specs=pl.BlockSpec((tm, 8), lambda i: (i, 0)),
        compiler_params=pltpu.CompilerParams(
            dimension_semantics=("parallel",),
            vmem_limit_bytes=_proj_vmem_budget(tm, Fp),
        ),
    )(x_pad, w_p)
    return out[:, 0], out[:, 1]


def pallas_merge(S_pad, A_pad, X_pad, C_pad, K, F):
    """X_new = (S@C)^T @ X  [K, F]  and  A_new = C^T @ A @ C  [K, K] (diag NOT zeroed here).

    S/X/C are f32; A is bf16 (0/1 indicator -> exact, halves its HBM stream).
    Grid: (split, node-tile). 'split' (size 2 on even tile counts) shards the reduction
    across TensorCores on v7x; each split owns a resident partial accumulator block.
    """
    Np = S_pad.shape[0]
    Kp = C_pad.shape[1]
    Fp = X_pad.shape[1]
    tn = min(_TILE_NODES, Np)
    num_tiles = Np // tn
    nsplit = 2 if (num_tiles >= 2 and num_tiles % 2 == 0) else 1
    tiles_per_split = num_tiles // nsplit

    def kernel(s_ref, a_ref, x_ref, c_ref, xnew_ref, anew_ref):
        p = pl.program_id(0)   # split index (parallel)
        t = pl.program_id(1)   # node-tile within split (reduction)

        @pl.when(t == 0)
        def _():
            xnew_ref[...] = jnp.zeros_like(xnew_ref)
            anew_ref[...] = jnp.zeros_like(anew_ref)

        c = c_ref[...]                                               # [Np, Kp] f32 resident
        sc = jnp.dot(s_ref[...], c, preferred_element_type=jnp.float32)          # [tn, Kp]
        ac = jnp.dot(a_ref[...].astype(jnp.float32), c,
                     preferred_element_type=jnp.float32)                         # [tn, Kp]

        # X_new += sc^T @ X_tile  (contracting-dim-0 dot_general; XLU has slack here)
        xnew_ref[...] += jax.lax.dot_general(
            sc, x_ref[...], (((0,), (0,)), ((), ())),
            preferred_element_type=jnp.float32)

        # A_new += C_rows(tile)^T @ (A_tile @ C); C rows sliced from the resident C
        # (Ct input eliminated).
        row0 = pl.multiple_of((p * tiles_per_split + t) * tn, tn)
        c_rows = c_ref[pl.ds(row0, tn), :]                           # [tn, Kp]
        anew_ref[...] += jax.lax.dot_general(
            c_rows, ac, (((0,), (0,)), ((), ())),
            preferred_element_type=jnp.float32)

    xnew_p, anew_p = pl.pallas_call(
        kernel,
        out_shape=(
            jax.ShapeDtypeStruct((nsplit, Kp, Fp), jnp.float32),
            jax.ShapeDtypeStruct((nsplit, Kp, Kp), jnp.float32),
        ),
        grid=(nsplit, tiles_per_split),
        in_specs=[
            pl.BlockSpec((tn, Np), lambda p, t: (p * tiles_per_split + t, 0)),  # S tiles
            pl.BlockSpec((tn, Np), lambda p, t: (p * tiles_per_split + t, 0)),  # A tiles (bf16)
            pl.BlockSpec((tn, Fp), lambda p, t: (p * tiles_per_split + t, 0)),  # X tiles
            pl.BlockSpec((Np, Kp), lambda p, t: (0, 0)),                        # C resident
        ],
        out_specs=(
            pl.BlockSpec((None, Kp, Fp), lambda p, t: (p, 0, 0)),  # per-split accumulator
            pl.BlockSpec((None, Kp, Kp), lambda p, t: (p, 0, 0)),  # per-split accumulator
        ),
        compiler_params=pltpu.CompilerParams(
            dimension_semantics=("parallel", "arbitrary"),
            vmem_limit_bytes=_merge_vmem_budget(tn, Np, Kp, Fp),
        ),
    )(S_pad, A_pad, X_pad, C_pad)

    X_new = jnp.sum(xnew_p, axis=0)[:K, :F]
    A_new = jnp.sum(anew_p, axis=0)[:K, :K]
    return X_new, A_new


# ----------------------------------------------------------------------------
# On-device dense build (single jitted pass, target dtypes, fused scatters)
# ----------------------------------------------------------------------------
@partial(jax.jit, static_argnames=("Np", "Kp"))
def _build_dense(src, dst, e, single, cluster, *, Np, Kp):
    n = cluster.shape[0]
    # S: edge scores + 1.0 on the diagonal for nodes with no contracted edge,
    # in one scatter (index sets are disjoint because self-loops were removed).
    s_rows = jnp.concatenate([src, single])
    s_cols = jnp.concatenate([dst, single])
    s_vals = jnp.concatenate([e, jnp.ones(single.shape, jnp.float32)])
    S = jnp.zeros((Np, Np), jnp.float32).at[s_rows, s_cols].set(s_vals)
    # A: 0/1 adjacency, stored bf16 (exact for indicators, halves HBM stream).
    A = jnp.zeros((Np, Np), jnp.bfloat16).at[src, dst].set(
        jnp.ones(src.shape, jnp.bfloat16))
    # C: cluster one-hot, f32 (feeds the f32 S @ C path).
    C = jnp.zeros((Np, Kp), jnp.float32).at[
        jnp.arange(n, dtype=jnp.int32), cluster].set(1.0)
    return S, A, C


# ----------------------------------------------------------------------------
# Host-side graph glue (data-dependent shapes, non-Pallas)
# ----------------------------------------------------------------------------
def _coalesce_undirected(edge_index, directed):
    src, dst = np.asarray(edge_index)
    m = src != dst                       # remove self loops
    src, dst = src[m], dst[m]
    if not directed:                     # add reversed edges
        src, dst = np.concatenate([src, dst]), np.concatenate([dst, src])
    pairs = np.stack([src, dst], axis=1)
    pairs = np.unique(pairs, axis=0)     # coalesce: sort by (src, dst) and dedupe
    return pairs[:, 0].astype(np.int64), pairs[:, 1].astype(np.int64)


def _connected_components(num_nodes, src, dst):
    """Weakly-connected components. Uses scipy (same as the torch reference) when
    available; falls back to a pure-Python union-find."""
    try:
        import scipy.sparse as sp
        from scipy.sparse.csgraph import connected_components as _cc
        adj = sp.coo_matrix(
            (np.ones(len(src), dtype=np.int8), (src, dst)),
            shape=(num_nodes, num_nodes))
        ncomp, labels = _cc(adj, directed=True, connection="weak")
        return labels.astype(np.int64), int(ncomp)
    except Exception:
        parent = list(range(num_nodes))

        def find(a):
            while parent[a] != a:
                parent[a] = parent[parent[a]]
                a = parent[a]
            return a

        for s, d in zip(src.tolist(), dst.tolist()):
            rs, rd = find(int(s)), find(int(d))
            if rs != rd:
                parent[rd] = rs

        labels = np.empty(num_nodes, dtype=np.int64)
        lab = {}
        for i in range(num_nodes):
            r = find(i)
            if r not in lab:
                lab[r] = len(lab)
            labels[i] = lab[r]
        return labels, len(lab)


def cluster_pooling_forward(x, edge_index, batch, weight, bias,
                            threshold=0.0, directed=False):
    """Mirrors ClusterPooling.forward (tanh edge score, threshold 0.0, dropout 0.0)."""
    x = jnp.asarray(x, jnp.float32)
    N, F = x.shape

    # --- edge preprocessing (host) ---
    src, dst = _coalesce_undirected(np.asarray(edge_index), directed)

    # --- padded node/feature extents (shared by both kernels) ---
    Np = max(_round_up(N, _TILE_NODES), _TILE_NODES)
    Fp = max(_round_up(F, 128), 128)
    x_pad = jnp.pad(x, ((0, Np - N), (0, Fp - F)))

    # --- edge scoring: e = tanh(x_src.w_src + x_dst.w_dst + b)  (Pallas + tiny [E] JAX) ---
    p_src, p_dst = pallas_node_projections(x_pad, jnp.asarray(weight, jnp.float32))
    src_j = jnp.asarray(src, jnp.int32)
    dst_j = jnp.asarray(dst, jnp.int32)
    e = jnp.tanh(p_src[src_j] + p_dst[dst_j] + jnp.asarray(bias, jnp.float32))
    # TODO(synk): dropout is p=0.0 (module default) -> identity; no RNG dropout implemented.
    e_np = np.asarray(e)   # single device->host sync required for component labelling

    # --- select edges, compute clusters (host) ---
    contract = e_np > threshold
    csrc, cdst = src[contract], dst[contract]
    cluster, K = _connected_components(N, csrc, cdst)
    Kp = max(_round_up(K, 128), 128)

    # nodes with no contracted edge incident (host, O(E))
    deg = np.zeros(N, np.int64)
    np.add.at(deg, csrc, 1)
    np.add.at(deg, cdst, 1)
    single = np.nonzero(deg == 0)[0].astype(np.int32)

    # --- dense S / A / C built on-device at padded shape (one jitted scatter pass) ---
    S, A, C = _build_dense(src_j, dst_j, e,
                           jnp.asarray(single, jnp.int32),
                           jnp.asarray(cluster, jnp.int32),
                           Np=Np, Kp=Kp)

    # --- merge (Pallas, tiled over nodes, split across TensorCores when possible) ---
    X_new, A_new = pallas_merge(S, A, x_pad, C, K, F)

    # --- coarsened edges, new batch ---
    diag = jnp.arange(K)
    A_new = A_new.at[diag, diag].set(0.0)           # fill_diagonal_(0), on device
    r, c = np.nonzero(np.asarray(A_new))            # dense_to_sparse (row-major)
    edge_index_new = jnp.asarray(np.stack([r, c]), jnp.int32)

    new_batch_np = np.zeros(K, np.int64)
    new_batch_np[cluster] = np.asarray(batch)       # scatter_(0, cluster, batch)
    new_batch = jnp.asarray(new_batch_np, jnp.int32)

    unpool_info = UnpoolDescription(
        edge_index=jnp.asarray(np.stack([src, dst]), jnp.int32),
        batch=jnp.asarray(batch),
        cluster_map=jnp.asarray(cluster, jnp.int32),
    )
    return X_new, edge_index_new, new_batch, unpool_info


# ----------------------------------------------------------------------------
# Demo
# ----------------------------------------------------------------------------
if __name__ == "__main__":
    key = jax.random.PRNGKey(0)
    in_channels = 8
    num_nodes = 12
    k_x, k_w, k_b = jax.random.split(key, 3)

    x = jax.random.normal(k_x, (num_nodes, in_channels), jnp.float32)

    # Two small graphs: nodes 0..5 -> batch 0, nodes 6..11 -> batch 1 (includes a self loop).
    edge_index = jnp.array(
        [
            [0, 1, 2, 3, 4, 5, 0, 2, 1, 6, 7, 8, 9, 10, 11, 6, 8, 7],
            [1, 2, 3, 4, 5, 0, 2, 4, 1, 7, 8, 9, 10, 11, 6, 8, 10, 7],
        ],
        dtype=jnp.int32,
    )
    batch = jnp.array([0] * 6 + [1] * 6, dtype=jnp.int32)

    # Deterministic Linear(2*in_channels, 1) init (uniform like torch reset_parameters).
    bound = 1.0 / np.sqrt(2 * in_channels)
    weight = jax.random.uniform(k_w, (2 * in_channels,), jnp.float32, -bound, bound)
    bias = jax.random.uniform(k_b, (), jnp.float32, -bound, bound)

    X_new, edge_index_new, new_batch, unpool_info = cluster_pooling_forward(
        x, edge_index, batch, weight, bias, threshold=0.0, directed=False
    )
    jax.block_until_ready(X_new)
    jax.block_until_ready(edge_index_new)
    jax.block_until_ready(new_batch)
    print("KERNEL_OK")
</pallas_src>

<mosaic_0001>
module attributes {stable_mosaic.version = 11 : i64} {
  func.func @_node_proj_kernel(%arg0: i32, %arg1: memref<256x128xf32, #tpu.memory_space<vmem>>, %arg2: memref<128x8xf32, #tpu.memory_space<vmem>>, %arg3: memref<256x8xf32, #tpu.memory_space<vmem>>) attributes {dimension_semantics = [#tpu.dimension_semantics<parallel>], iteration_bounds = array<i64: 1>, scalar_prefetch = 0 : i64, scratch_operands = 0 : i64, tpu.core_type = #tpu.core_type<tc>, window_params = [{transform_indices = @transform_0, window_bounds = array<i64: 256, 128>}, {pipeline_mode = #tpu.pipeline_mode<synchronous>, transform_indices = @transform_1, window_bounds = array<i64: 128, 8>}, {transform_indices = @transform_2, window_bounds = array<i64: 256, 8>}]} {
    %c0 = arith.constant 0 : index
    %c0_0 = arith.constant 0 : index
    %0 = vector.load %arg1[%c0, %c0_0] : memref<256x128xf32, #tpu.memory_space<vmem>>, vector<256x128xf32>
    %c0_1 = arith.constant 0 : index
    %c0_2 = arith.constant 0 : index
    %1 = vector.load %arg2[%c0_1, %c0_2] : memref<128x8xf32, #tpu.memory_space<vmem>>, vector<128x8xf32>
    %cst = arith.constant dense<0.000000e+00> : vector<256x8xf32>
    %2 = tpu.matmul %0, %1, %cst {dimension_numbers = #tpu.dot_dimension_numbers<[1], [0], [0], [1], [0, 0, 1, 1], [], []>} : vector<256x128xf32>, vector<128x8xf32>, vector<256x8xf32> -> vector<256x8xf32>
    %c0_3 = arith.constant 0 : index
    %c0_4 = arith.constant 0 : index
    %3 = vector.load %arg3[%c0_3, %c0_4] : memref<256x8xf32, #tpu.memory_space<vmem>>, vector<256x8xf32>
    tpu.vector_store %arg3[%c0_3, %c0_4], %2 {strides = array<i32>} : memref<256x8xf32, #tpu.memory_space<vmem>>, vector<256x8xf32>,
    return
  }
  func.func @transform_0(%arg0: i32) -> (i32, i32) {
    %c0_i32 = arith.constant 0 : i32
    %c0_i32_0 = arith.constant 0 : i32
    return %arg0, %c0_i32 : i32, i32
  }
  func.func @transform_1(%arg0: i32) -> (i32, i32) {
    %c0_i32 = arith.constant 0 : i32
    %c0_i32_0 = arith.constant 0 : i32
    %c0_i32_1 = arith.constant 0 : i32
    return %c0_i32, %c0_i32_0 : i32, i32
  }
  func.func @transform_2(%arg0: i32) -> (i32, i32) {
    %c0_i32 = arith.constant 0 : i32
    %c0_i32_0 = arith.constant 0 : i32
    return %arg0, %c0_i32 : i32, i32
  }
}

</mosaic_0001>

<llo_original>
// kernel: tpu_custom_call.1
$region0: #{tpu_custom_call.1}
  #allocation0 [shape = 'u32[]', space=smem, size = 0x4, offset = 0x4, fixed_abs, tag = 'smem constant byte address 0x4 - core index']
  #allocation1 [shape = 'u32[72,128]{1,0:T(1,128)}', space=vmem, size = 0x9000, scoped, tag = 'internal scratch']
  %s0 = inlined_call_operand.hbm [shape: f32[256,128], index: 0, kind: input, shape index: {}]
  %s1 = inlined_call_operand.vmem [shape: f32[128,8], index: 1, kind: input, shape index: {}]
  %s2 = inlined_call_operand.vmem [shape: f32[256,8], index: 2, kind: output, shape index: {}]
  %s3 = sld [smem:[#allocation0]]
  $region22: #{tpu_custom_call.1} parent=0
    _
  %s5 = ssub.s32 1, %s3
  %s6 = scalar_select 0, %s5, %s3
  $region1: #{tpu_custom_call.1} parent=0
    #allocation2 [shape = 'u8[131072]{0}', space=vmem, size = 0x20000, scoped, tag = 'input window, operand 0, single buffered']
    #allocation3 [shape = 's32[1]{0}', space=sflag, size = 0x4, scoped, tag = 'scoped memory for tpu_custom_call.1']
    %7 = vsyncpa [#allocation3], 0
    // Predicated region
    $region2: #{tpu_custom_call.1} parent=1 // pred_check
      _
    $region3: #{tpu_custom_call.1} parent=1 // pred_check_branch
      %9 = sbr.rel (0) target = $region5
    $region4: #{tpu_custom_call.1} parent=1 // pred_region
      %11 = vsyncadd [#allocation3], 0
      %s12 = sshll.u32 %s0, 4
      %s13 = int_to_ptr.hbm [resolvable:$true] %s12
      %s14 = sshll.u32 [#allocation2], 4
      %s15 = int_to_ptr.vmem [resolvable:$true] %s14
      %20 = dma.hbm_to_vmem [thread:$0]  %s13, 4096, %s15, [#allocation3], 128, 128, 8
    $region5: #{tpu_custom_call.1} parent=1 // pred_fallthru
      _
    // Predicated region
    $region6: #{tpu_custom_call.1} parent=1 // pred_check
      _
    $region7: #{tpu_custom_call.1} parent=1 // pred_check_branch
      %22 = sbr.rel (0) target = $region9
    $region8: #{tpu_custom_call.1} parent=1 // pred_region
      _
    $region9: #{tpu_custom_call.1} parent=1 // pred_fallthru
      _
    // Predicated region
    $region10: #{tpu_custom_call.1} parent=1 // pred_check
      _
    $region11: #{tpu_custom_call.1} parent=1 // pred_check_branch
      %24 = sbr.rel (0) target = $region13
    $region12: #{tpu_custom_call.1} parent=1 // pred_region
      %26 = dma.done [#allocation3], 4096
    $region13: #{tpu_custom_call.1} parent=1 // pred_fallthru
      _
    %v27 = vld [vmem:[#allocation2] sm:$0xff]
    %v28 = vld [vmem:[#allocation2 + $0x8] sm:$0xff]
    %v29 = vld [vmem:[#allocation2 + $0x10] sm:$0xff]
    %v30 = vld [vmem:[#allocation2 + $0x18] sm:$0xff]
    %v31 = vld [vmem:[#allocation2 + $0x20] sm:$0xff]
    %v32 = vld [vmem:[#allocation2 + $0x28] sm:$0xff]
    %v33 = vld [vmem:[#allocation2 + $0x30] sm:$0xff]
    %v34 = vld [vmem:[#allocation2 + $0x38] sm:$0xff]
    %v35 = vld [vmem:[#allocation2 + $0x40] sm:$0xff]
    %v36 = vld [vmem:[#allocation2 + $0x48] sm:$0xff]
    %v37 = vld [vmem:[#allocation2 + $0x50] sm:$0xff]
    %v38 = vld [vmem:[#allocation2 + $0x58] sm:$0xff]
    %v39 = vld [vmem:[#allocation2 + $0x60] sm:$0xff]
    %v40 = vld [vmem:[#allocation2 + $0x68] sm:$0xff]
    %v41 = vld [vmem:[#allocation2 + $0x70] sm:$0xff]
    %v42 = vld [vmem:[#allocation2 + $0x78] sm:$0xff]
    %v43 = vld [vmem:[#allocation2 + $0x80] sm:$0xff]
    %v44 = vld [vmem:[#allocation2 + $0x88] sm:$0xff]
    %v45 = vld [vmem:[#allocation2 + $0x90] sm:$0xff]
    %v46 = vld [vmem:[#allocation2 + $0x98] sm:$0xff]
    %v47 = vld [vmem:[#allocation2 + $0xa0] sm:$0xff]
    %v48 = vld [vmem:[#allocation2 + $0xa8] sm:$0xff]
    %v49 = vld [vmem:[#allocation2 + $0xb0] sm:$0xff]
    %v50 = vld [vmem:[#allocation2 + $0xb8] sm:$0xff]
    %v51 = vld [vmem:[#allocation2 + $0xc0] sm:$0xff]
    %v52 = vld [vmem:[#allocation2 + $0xc8] sm:$0xff]
    %v53 = vld [vmem:[#allocation2 + $0xd0] sm:$0xff]
    %v54 = vld [vmem:[#allocation2 + $0xd8] sm:$0xff]
    %v55 = vld [vmem:[#allocation2 + $0xe0] sm:$0xff]
    %v56 = vld [vmem:[#allocation2 + $0xe8] sm:$0xff]
    %v57 = vld [vmem:[#allocation2 + $0xf0] sm:$0xff]
    %v58 = vld [vmem:[#allocation2 + $0xf8] sm:$0xff]
    %v59 = vld [vmem:[%s1] sm:$0xff]
    %v60 = vld [vmem:[%s1 + $0x8] sm:$0xff]
    %v61 = vld [vmem:[%s1 + $0x10] sm:$0xff]
    %v62 = vld [vmem:[%s1 + $0x18] sm:$0xff]
    %v63 = vld [vmem:[%s1 + $0x20] sm:$0xff]
    %v64 = vld [vmem:[%s1 + $0x28] sm:$0xff]
    %v65 = vld [vmem:[%s1 + $0x30] sm:$0xff]
    %v66 = vld [vmem:[%s1 + $0x38] sm:$0xff]
    %v67 = vld [vmem:[%s1 + $0x40] sm:$0xff]
    %v68 = vld [vmem:[%s1 + $0x48] sm:$0xff]
    %v69 = vld [vmem:[%s1 + $0x50] sm:$0xff]
    %v70 = vld [vmem:[%s1 + $0x58] sm:$0xff]
    %v71 = vld [vmem:[%s1 + $0x60] sm:$0xff]
    %v72 = vld [vmem:[%s1 + $0x68] sm:$0xff]
    %v73 = vld [vmem:[%s1 + $0x70] sm:$0xff]
    %v74 = vld [vmem:[%s1 + $0x78] sm:$0xff]
    %75 = vmatpush.msra.mxu0 %v74
    %76 = vmatpush.msra.mxu0 %v73
    %77 = vmatpush.msra.mxu0 %v72
    %78 = vmatpush.msra.mxu0 %v71
    %79 = vmatpush.msra.mxu0 %v70
    %80 = vmatpush.msra.mxu0 %v69
    %81 = vmatpush.msra.mxu0 %v68
    %82 = vmatpush.msra.mxu0 %v67
    %83 = vmatpush.msra.mxu0 %v66
    %84 = vmatpush.msra.mxu0 %v65
    %85 = vmatpush.msra.mxu0 %v64
    %86 = vmatpush.msra.mxu0 %v63
    %87 = vmatpush.msra.mxu0 %v62
    %88 = vmatpush.msra.mxu0 %v61
    %89 = vmatpush.msra.mxu0 %v60
    %90 = vmatpush.msra.mxu0 %v59
    %91 = vmatmul.f32.gmra.mxu0 %v27
    %v92 = vpop.f32.mrf.mxu0
    %v93 = vadd.f32 0.0, %v92
    %94 = vmatmul.f32.gmra.mxu0 %v28
    %v95 = vpop.f32.mrf.mxu0
    %v96 = vadd.f32 0.0, %v95
    %97 = vmatmul.f32.gmra.mxu0 %v29
    %v98 = vpop.f32.mrf.mxu0
    %v99 = vadd.f32 0.0, %v98
    %100 = vmatmul.f32.gmra.mxu0 %v30
    %v101 = vpop.f32.mrf.mxu0
    %v102 = vadd.f32 0.0, %v101
    %103 = vmatmul.f32.gmra.mxu0 %v31
    %v104 = vpop.f32.mrf.mxu0
    %v105 = vadd.f32 0.0, %v104
    %106 = vmatmul.f32.gmra.mxu0 %v32
    %v107 = vpop.f32.mrf.mxu0
    %v108 = vadd.f32 0.0, %v107
    %109 = vmatmul.f32.gmra.mxu0 %v33
    %v110 = vpop.f32.mrf.mxu0
    %v111 = vadd.f32 0.0, %v110
    %112 = vmatmul.f32.gmra.mxu0 %v34
    %v113 = vpop.f32.mrf.mxu0
    %v114 = vadd.f32 0.0, %v113
    %115 = vmatmul.f32.gmra.mxu0 %v35
    %v116 = vpop.f32.mrf.mxu0
    %v117 = vadd.f32 0.0, %v116
    %118 = vmatmul.f32.gmra.mxu0 %v36
    %v119 = vpop.f32.mrf.mxu0
    %v120 = vadd.f32 0.0, %v119
    %121 = vmatmul.f32.gmra.mxu0 %v37
    %v122 = vpop.f32.mrf.mxu0
    %v123 = vadd.f32 0.0, %v122
    %124 = vmatmul.f32.gmra.mxu0 %v38
    %v125 = vpop.f32.mrf.mxu0
    %v126 = vadd.f32 0.0, %v125
    %127 = vmatmul.f32.gmra.mxu0 %v39
    %v128 = vpop.f32.mrf.mxu0
    %v129 = vadd.f32 0.0, %v128
    %130 = vmatmul.f32.gmra.mxu0 %v40
    %v131 = vpop.f32.mrf.mxu0
    %v132 = vadd.f32 0.0, %v131
    %133 = vmatmul.f32.gmra.mxu0 %v41
    %v134 = vpop.f32.mrf.mxu0
    %v135 = vadd.f32 0.0, %v134
    %136 = vmatmul.f32.gmra.mxu0 %v42
    %v137 = vpop.f32.mrf.mxu0
    %v138 = vadd.f32 0.0, %v137
    %139 = vmatmul.f32.gmra.mxu0 %v43
    %v140 = vpop.f32.mrf.mxu0
    %v141 = vadd.f32 0.0, %v140
    %142 = vmatmul.f32.gmra.mxu0 %v44
    %v143 = vpop.f32.mrf.mxu0
    %v144 = vadd.f32 0.0, %v143
    %145 = vmatmul.f32.gmra.mxu0 %v45
    %v146 = vpop.f32.mrf.mxu0
    %v147 = vadd.f32 0.0, %v146
    %148 = vmatmul.f32.gmra.mxu0 %v46
    %v149 = vpop.f32.mrf.mxu0
    %v150 = vadd.f32 0.0, %v149
    %151 = vmatmul.f32.gmra.mxu0 %v47
    %v152 = vpop.f32.mrf.mxu0
    %v153 = vadd.f32 0.0, %v152
    %154 = vmatmul.f32.gmra.mxu0 %v48
    %v155 = vpop.f32.mrf.mxu0
    %v156 = vadd.f32 0.0, %v155
    %157 = vmatmul.f32.gmra.mxu0 %v49
    %v158 = vpop.f32.mrf.mxu0
    %v159 = vadd.f32 0.0, %v158
    %160 = vmatmul.f32.gmra.mxu0 %v50
    %v161 = vpop.f32.mrf.mxu0
    %v162 = vadd.f32 0.0, %v161
    %163 = vmatmul.f32.gmra.mxu0 %v51
    %v164 = vpop.f32.mrf.mxu0
    %v165 = vadd.f32 0.0, %v164
    %166 = vmatmul.f32.gmra.mxu0 %v52
    %v167 = vpop.f32.mrf.mxu0
    %v168 = vadd.f32 0.0, %v167
    %169 = vmatmul.f32.gmra.mxu0 %v53
    %v170 = vpop.f32.mrf.mxu0
    %v171 = vadd.f32 0.0, %v170
    %172 = vmatmul.f32.gmra.mxu0 %v54
    %v173 = vpop.f32.mrf.mxu0
    %v174 = vadd.f32 0.0, %v173
    %175 = vmatmul.f32.gmra.mxu0 %v55
    %v176 = vpop.f32.mrf.mxu0
    %v177 = vadd.f32 0.0, %v176
    %178 = vmatmul.f32.gmra.mxu0 %v56
    %v179 = vpop.f32.mrf.mxu0
    %v180 = vadd.f32 0.0, %v179
    %181 = vmatmul.f32.gmra.mxu0 %v57
    %v182 = vpop.f32.mrf.mxu0
    %v183 = vadd.f32 0.0, %v182
    %184 = vmatmul.f32.gmra.mxu0 %v58
    %v185 = vpop.f32.mrf.mxu0
    %v186 = vadd.f32 0.0, %v185
    %187 = vdwg.mxu0
    %vm188 = vcmask 64512
    %189 = vst.msk [vmem:[%s2] sm:$0xff] %vm188, %v93
    %190 = vst.msk [vmem:[%s2 + $0x8] sm:$0xff] %vm188, %v96
    %191 = vst.msk [vmem:[%s2 + $0x10] sm:$0xff] %vm188, %v99
    %192 = vst.msk [vmem:[%s2 + $0x18] sm:$0xff] %vm188, %v102
    %193 = vst.msk [vmem:[%s2 + $0x20] sm:$0xff] %vm188, %v105
    %194 = vst.msk [vmem:[%s2 + $0x28] sm:$0xff] %vm188, %v108
    %195 = vst.msk [vmem:[%s2 + $0x30] sm:$0xff] %vm188, %v111
    %196 = vst.msk [vmem:[%s2 + $0x38] sm:$0xff] %vm188, %v114
    %197 = vst.msk [vmem:[%s2 + $0x40] sm:$0xff] %vm188, %v117
    %198 = vst.msk [vmem:[%s2 + $0x48] sm:$0xff] %vm188, %v120
    %199 = vst.msk [vmem:[%s2 + $0x50] sm:$0xff] %vm188, %v123
    %200 = vst.msk [vmem:[%s2 + $0x58] sm:$0xff] %vm188, %v126
    %201 = vst.msk [vmem:[%s2 + $0x60] sm:$0xff] %vm188, %v129
    %202 = vst.msk [vmem:[%s2 + $0x68] sm:$0xff] %vm188, %v132
    %203 = vst.msk [vmem:[%s2 + $0x70] sm:$0xff] %vm188, %v135
    %204 = vst.msk [vmem:[%s2 + $0x78] sm:$0xff] %vm188, %v138
    %205 = vst.msk [vmem:[%s2 + $0x80] sm:$0xff] %vm188, %v141
    %206 = vst.msk [vmem:[%s2 + $0x88] sm:$0xff] %vm188, %v144
    %207 = vst.msk [vmem:[%s2 + $0x90] sm:$0xff] %vm188, %v147
    %208 = vst.msk [vmem:[%s2 + $0x98] sm:$0xff] %vm188, %v150
    %209 = vst.msk [vmem:[%s2 + $0xa0] sm:$0xff] %vm188, %v153
    %210 = vst.msk [vmem:[%s2 + $0xa8] sm:$0xff] %vm188, %v156
    %211 = vst.msk [vmem:[%s2 + $0xb0] sm:$0xff] %vm188, %v159
    %212 = vst.msk [vmem:[%s2 + $0xb8] sm:$0xff] %vm188, %v162
    %213 = vst.msk [vmem:[%s2 + $0xc0] sm:$0xff] %vm188, %v165
    %214 = vst.msk [vmem:[%s2 + $0xc8] sm:$0xff] %vm188, %v168
    %215 = vst.msk [vmem:[%s2 + $0xd0] sm:$0xff] %vm188, %v171
    %216 = vst.msk [vmem:[%s2 + $0xd8] sm:$0xff] %vm188, %v174
    %217 = vst.msk [vmem:[%s2 + $0xe0] sm:$0xff] %vm188, %v177
    %218 = vst.msk [vmem:[%s2 + $0xe8] sm:$0xff] %vm188, %v180
    %219 = vst.msk [vmem:[%s2 + $0xf0] sm:$0xff] %vm188, %v183
    %220 = vst.msk [vmem:[%s2 + $0xf8] sm:$0xff] %vm188, %v186
    // Predicated region
    $region14: #{tpu_custom_call.1} parent=1 // pred_check
      _
    $region15: #{tpu_custom_call.1} parent=1 // pred_check_branch
      %222 = sbr.rel (0) target = $region17
    $region16: #{tpu_custom_call.1} parent=1 // pred_region
      _
    $region17: #{tpu_custom_call.1} parent=1 // pred_fallthru
      _
    // Predicated region
    $region18: #{tpu_custom_call.1} parent=1 // pred_check
      _
    $region19: #{tpu_custom_call.1} parent=1 // pred_check_branch
      %224 = sbr.rel (0) target = $region21
    $region20: #{tpu_custom_call.1} parent=1 // pred_region
      _
    $region21: #{tpu_custom_call.1} parent=1 // pred_fallthru
      _
    %225 = vsyncpa [#allocation3], 1

</llo_original>
